<compile_context>
chip_gen: v7x
topology: tpu7x:2x2x1
jax: 0.10.0
libtpu: 0.0.40
codegen_flags: <defaults>
</compile_context>

<pallas_src>
import jax
import jax.numpy as jnp
from jax import lax
from jax.experimental import pallas as pl
from jax.experimental.pallas import tpu as pltpu


def _cdiv(a, b):
    return -(-a // b)


def _round_up(x, m):
    return _cdiv(x, m) * m


def _tpu_config():
    """Generation-aware tiling / VMEM limits (v7x has 64 MiB VMEM and 2 TCs)."""
    try:
        kind = jax.devices()[0].device_kind.lower()
    except Exception:
        kind = ""
    if "v7" in kind:
        return dict(gen="v7x", tv_max=4096, vmem_limit=56 * 1024 * 1024)
    if "v6" in kind or "v5" in kind:
        return dict(gen="v5e/v6e", tv_max=8192, vmem_limit=96 * 1024 * 1024)
    # Unknown generation: conservative defaults that fit any TPU.
    return dict(gen="unknown", tv_max=2048, vmem_limit=48 * 1024 * 1024)


# ---------------------------------------------------------------------------
# MLMHead: one-time parameter preparation (hoisted off the per-call hot path)
# ---------------------------------------------------------------------------
def prepare_mlm_head_params(w_mlm, b_mlm, *, compute_dtype=jnp.bfloat16):
    """Cast the MLM projection to bf16 and pad the vocab axis to the tile grid.

    w_mlm: (H, V) f32 (pre-transposed torch weight); b_mlm: (V,).
    Returns a dict consumed by `mlm_head`.
    """
    cfg = _tpu_config()
    H, V = w_mlm.shape

    V_128 = _round_up(V, 128)
    num_v = max(1, _cdiv(V_128, cfg["tv_max"]))
    if cfg["gen"] == "v7x" and V_128 > 128:
        # Megacore: keep an even, >=2 tile parallel vocab axis.
        num_v = max(num_v, 2)
        if num_v % 2:
            num_v += 1
    tv = _round_up(_cdiv(V_128, num_v), 128)
    V_pad = tv * num_v

    w = w_mlm.astype(compute_dtype)
    b = b_mlm.astype(jnp.float32).reshape(1, V)
    if V_pad != V:
        w = jnp.pad(w, ((0, 0), (0, V_pad - V)))
        b = jnp.pad(b, ((0, 0), (0, V_pad - V)))

    return {
        "w": w, "b": b,
        "H": H, "V": V, "V_pad": V_pad, "tv": tv, "num_v": num_v,
        "vmem_limit": cfg["vmem_limit"], "gen": cfg["gen"],
        "compute_dtype": compute_dtype,
    }


# ---------------------------------------------------------------------------
# MLMHead kernel: tiled matmul  (M, H) x (H, V) + bias -> (M, V) logits
#   (output_probabilities=False in the wiki TaskFactory path => no softmax)
# ---------------------------------------------------------------------------
def _mlm_head_kernel(x_ref, w_ref, b_ref, o_ref):
    acc = jnp.dot(x_ref[...], w_ref[...], preferred_element_type=jnp.float32)
    o_ref[...] = (acc + b_ref[...]).astype(o_ref.dtype)


def _maybe_buffered_spec(block_shape, index_map, nsteps):
    if nsteps >= 3:
        return pl.BlockSpec(block_shape, index_map, pipeline_mode=pl.Buffered(3))
    return pl.BlockSpec(block_shape, index_map)


def mlm_head(hidden, mlm_params, *, tm=512, out_dtype=jnp.bfloat16):
    """hidden: (B, S, H); mlm_params from prepare_mlm_head_params -> (B, S, V) bf16."""
    B, S, H = hidden.shape
    assert H == mlm_params["H"]
    V, V_pad = mlm_params["V"], mlm_params["V_pad"]
    tv, num_v = mlm_params["tv"], mlm_params["num_v"]
    vmem_limit = mlm_params["vmem_limit"]
    cdt = mlm_params["compute_dtype"]
    w, b = mlm_params["w"], mlm_params["b"]

    M = B * S
    cbytes = jnp.dtype(cdt).itemsize
    obytes = jnp.dtype(out_dtype).itemsize
    sub = 8 * (4 // cbytes)                      # 8 sublanes f32, 16 for bf16

    x2d = hidden.reshape(M, H).astype(cdt)

    # --- Fast path: activations resident in VMEM, grid over vocab stripes only.
    M_res = _round_up(M, sub)
    resident_bytes = (2 * M_res * H * cbytes      # x (double-buffered alloc)
                      + 3 * H * tv * cbytes       # weight stripes
                      + 2 * M_res * tv * obytes   # output stripes
                      + 2 * tv * 4)               # bias
    use_resident = resident_bytes <= int(0.7 * vmem_limit)

    if use_resident:
        M_pad = M_res
        grid = (num_v,)
        in_specs = [
            pl.BlockSpec((M_pad, H), lambda j: (0, 0)),                 # resident x
            _maybe_buffered_spec((H, tv), lambda j: (0, j), num_v),     # streamed w
            pl.BlockSpec((1, tv), lambda j: (0, j)),                    # bias stripe
        ]
        out_specs = pl.BlockSpec((M_pad, tv), lambda j: (0, j))
        dim_sem = ("parallel",)
    else:
        # --- General path: (V outer, M inner) grid, weight stripe resident
        # across the inner M loop; balanced M tiling to avoid over-padding.
        tm_eff = min(tm, _round_up(M, sub))

        def _p2_bytes(t):
            return (2 * t * H * cbytes + 3 * H * tv * cbytes
                    + 2 * t * tv * obytes + 2 * tv * 4)

        while tm_eff > sub and _p2_bytes(tm_eff) > int(0.7 * vmem_limit):
            tm_eff = max(sub, _round_up(tm_eff // 2, sub))
        num_m = _cdiv(M, tm_eff)
        tm_eff = _round_up(_cdiv(M, num_m), sub)
        M_pad = tm_eff * num_m

        grid = (num_v, num_m)
        in_specs = [
            pl.BlockSpec((tm_eff, H), lambda j, i: (i, 0)),             # streamed x
            _maybe_buffered_spec((H, tv), lambda j, i: (0, j), num_v),  # resident w
            pl.BlockSpec((1, tv), lambda j, i: (0, j)),                 # bias stripe
        ]
        out_specs = pl.BlockSpec((tm_eff, tv), lambda j, i: (i, j))
        dim_sem = ("parallel", "parallel")

    if M_pad != M:
        x2d = jnp.pad(x2d, ((0, M_pad - M), (0, 0)))

    cost = pl.CostEstimate(
        flops=2 * M_pad * H * V_pad,
        transcendentals=0,
        bytes_accessed=(M_pad * H * cbytes + H * V_pad * cbytes
                        + V_pad * 4 + M_pad * V_pad * obytes),
    )

    out = pl.pallas_call(
        _mlm_head_kernel,
        out_shape=jax.ShapeDtypeStruct((M_pad, V_pad), out_dtype),
        grid_spec=pltpu.PrefetchScalarGridSpec(
            num_scalar_prefetch=0,
            grid=grid,
            in_specs=in_specs,
            out_specs=out_specs,
        ),
        compiler_params=pltpu.CompilerParams(
            dimension_semantics=dim_sem,
            vmem_limit_bytes=vmem_limit,
        ),
        cost_estimate=cost,
    )(x2d, w, b)

    return out[:M, :V].reshape(B, S, V)


# ---------------------------------------------------------------------------
# ClassificationHead kernel: pooled CLS token -> linear -> softmax over classes
#   (mnli path: input_dim=hidden, output_dim=3, output_probabilities -> softmax)
#   Output columns are padded to 128 lanes (lane-dense store); padded lanes are
#   masked out of the softmax and sliced away in the wrapper.
# ---------------------------------------------------------------------------
def classification_head(hidden, w_cls, b_cls, *, compute_dtype=jnp.bfloat16):
    """hidden: (B, S, H); w_cls: (H, C); b_cls: (C,) -> probs (B, C) f32."""
    B, S, H = hidden.shape
    C = w_cls.shape[1]
    C_pad = _round_up(C, 128)

    x_pooled = hidden[:, 0].astype(compute_dtype)          # pool_seq=True: CLS token
    w = jnp.pad(w_cls.astype(compute_dtype), ((0, 0), (0, C_pad - C)))
    b2d = jnp.pad(b_cls.astype(jnp.float32).reshape(1, C), ((0, 0), (0, C_pad - C)))

    def _cls_head_kernel(x_ref, w_ref, b_ref, o_ref):
        logits = (
            jnp.dot(x_ref[...], w_ref[...], preferred_element_type=jnp.float32)
            + b_ref[...]
        )
        col = lax.broadcasted_iota(jnp.int32, logits.shape, 1)
        logits = jnp.where(col < C, logits, -jnp.inf)        # mask padded classes
        m = jnp.max(logits, axis=-1, keepdims=True)
        e = jnp.exp(logits - m)
        denom = jnp.sum(e, axis=-1, keepdims=True)
        o_ref[...] = (e / denom).astype(o_ref.dtype)         # exact normalization

    out = pl.pallas_call(
        _cls_head_kernel,
        out_shape=jax.ShapeDtypeStruct((B, C_pad), jnp.float32),
        grid_spec=pltpu.PrefetchScalarGridSpec(
            num_scalar_prefetch=0,
            grid=(1,),
            in_specs=[
                pl.BlockSpec((B, H), lambda i: (0, 0)),
                pl.BlockSpec((H, C_pad), lambda i: (0, 0)),
                pl.BlockSpec((1, C_pad), lambda i: (0, 0)),
            ],
            out_specs=pl.BlockSpec((B, C_pad), lambda i: (0, 0)),
        ),
        compiler_params=pltpu.CompilerParams(
            dimension_semantics=("arbitrary",),
        ),
    )(x_pooled, w, b2d)
    return out[:, :C]


# ---------------------------------------------------------------------------
# TaskModel wrapper (mirrors RobertaTaskModel.forward: encoder -> task head)
# ---------------------------------------------------------------------------
def taskmodel_forward(hidden_states, params, task):
    # TODO(synk): `hidden_states` stands in for encoder(*args)[0] (HF RoBERTa stack).
    if task == "wiki":       # MLMHead
        return mlm_head(hidden_states, params["mlm_head"])
    elif task == "mnli":     # ClassificationHead
        return classification_head(hidden_states, params["w_cls"], params["b_cls"])
    else:
        raise NotImplementedError(task)


if __name__ == "__main__":
    # Small shapes consistent with the module: batch=2, seq=8, hidden=32,
    # vocab=256, classes=3.
    B, S, H, V, C = 2, 8, 32, 256, 3

    key = jax.random.PRNGKey(0)
    k_hid, k_wm, k_bm, k_wc, k_bc = jax.random.split(key, 5)

    # "Encoder output" hidden states (synthetic, deterministic).
    hidden = jax.random.normal(k_hid, (B, S, H), dtype=jnp.float32)

    # Deterministic parameter init (PyTorch nn.Linear-style uniform bound).
    bound = 1.0 / jnp.sqrt(H)
    params = {
        # stored as (in_dim, out_dim) == torch weight transposed
        "w_mlm": jax.random.uniform(k_wm, (H, V), jnp.float32, -bound, bound),
        "b_mlm": jax.random.uniform(k_bm, (V,), jnp.float32, -bound, bound),
        "w_cls": jax.random.uniform(k_wc, (H, C), jnp.float32, -bound, bound),
        "b_cls": jax.random.uniform(k_bc, (C,), jnp.float32, -bound, bound),
    }
    # One-time weight prep (hoisted out of the per-forward hot path).
    params["mlm_head"] = prepare_mlm_head_params(params["w_mlm"], params["b_mlm"])

    # MLM (wiki) path — kernel computes in bf16 with f32 accumulation and writes
    # bf16 logits; compare against the bf16-faithful reference.
    mlm_logits = jax.block_until_ready(taskmodel_forward(hidden, params, "wiki"))
    x_bf = hidden.reshape(B * S, H).astype(jnp.bfloat16).astype(jnp.float32)
    w_bf = params["w_mlm"].astype(jnp.bfloat16).astype(jnp.float32)
    ref_mlm = x_bf @ w_bf + params["b_mlm"]
    assert mlm_logits.shape == (B, S, V)
    assert mlm_logits.dtype == jnp.bfloat16
    assert jnp.allclose(
        mlm_logits.astype(jnp.float32).reshape(B * S, V), ref_mlm,
        atol=2e-2, rtol=2e-2)

    # Classification (mnli) path.
    cls_probs = jax.block_until_ready(taskmodel_forward(hidden, params, "mnli"))
    x0_bf = hidden[:, 0].astype(jnp.bfloat16).astype(jnp.float32)
    wc_bf = params["w_cls"].astype(jnp.bfloat16).astype(jnp.float32)
    ref_logits = x0_bf @ wc_bf + params["b_cls"]
    ref_probs = jax.nn.softmax(ref_logits, axis=-1)
    assert cls_probs.shape == (B, C)
    assert jnp.allclose(cls_probs, ref_probs, atol=1e-2, rtol=1e-2)

    print("KERNEL_OK")
</pallas_src>

<mosaic_0001>
module attributes {stable_mosaic.version = 11 : i64} {
  func.func @_mlm_head_kernel(%arg0: i32, %arg1: memref<16x32xbf16, #tpu.memory_space<vmem>>, %arg2: memref<32x256xbf16, #tpu.memory_space<vmem>>, %arg3: memref<1x256xf32, #tpu.memory_space<vmem>>, %arg4: memref<16x256xbf16, #tpu.memory_space<vmem>>) attributes {dimension_semantics = [#tpu.dimension_semantics<parallel>], iteration_bounds = array<i64: 1>, scalar_prefetch = 0 : i64, scratch_operands = 0 : i64, tpu.core_type = #tpu.core_type<tc>, window_params = [{pipeline_mode = #tpu.pipeline_mode<synchronous>, transform_indices = @transform_0, window_bounds = array<i64: 16, 32>}, {transform_indices = @transform_1, window_bounds = array<i64: 32, 256>}, {transform_indices = @transform_2, window_bounds = array<i64: 1, 256>}, {transform_indices = @transform_3, window_bounds = array<i64: 16, 256>}]} {
    %c0 = arith.constant 0 : index
    %c0_0 = arith.constant 0 : index
    %0 = vector.load %arg1[%c0, %c0_0] : memref<16x32xbf16, #tpu.memory_space<vmem>>, vector<16x32xbf16>
    %c0_1 = arith.constant 0 : index
    %c0_2 = arith.constant 0 : index
    %1 = vector.load %arg2[%c0_1, %c0_2] : memref<32x256xbf16, #tpu.memory_space<vmem>>, vector<32x256xbf16>
    %cst = arith.constant dense<0.000000e+00> : vector<16x256xf32>
    %2 = tpu.matmul %0, %1, %cst {dimension_numbers = #tpu.dot_dimension_numbers<[1], [0], [0], [1], [0, 0, 1, 1], [], []>} : vector<16x32xbf16>, vector<32x256xbf16>, vector<16x256xf32> -> vector<16x256xf32>
    %c0_3 = arith.constant 0 : index
    %c0_4 = arith.constant 0 : index
    %3 = vector.load %arg3[%c0_3, %c0_4] : memref<1x256xf32, #tpu.memory_space<vmem>>, vector<1x256xf32>
    %4 = vector.broadcast %3 : vector<1x256xf32> to vector<16x256xf32>
    %5 = arith.addf %2, %4 : vector<16x256xf32>
    %6 = arith.truncf %5 : vector<16x256xf32> to vector<16x256xbf16>
    %c0_5 = arith.constant 0 : index
    %c0_6 = arith.constant 0 : index
    %7 = vector.load %arg4[%c0_5, %c0_6] : memref<16x256xbf16, #tpu.memory_space<vmem>>, vector<16x256xbf16>
    tpu.vector_store %arg4[%c0_5, %c0_6], %6 {strides = array<i32>} : memref<16x256xbf16, #tpu.memory_space<vmem>>, vector<16x256xbf16>,
    return
  }
  func.func @transform_0(%arg0: i32) -> (i32, i32) {
    %c0_i32 = arith.constant 0 : i32
    %c0_i32_0 = arith.constant 0 : i32
    %c0_i32_1 = arith.constant 0 : i32
    return %c0_i32, %c0_i32_0 : i32, i32
  }
  func.func @transform_1(%arg0: i32) -> (i32, i32) {
    %c0_i32 = arith.constant 0 : i32
    %c0_i32_0 = arith.constant 0 : i32
    return %c0_i32, %arg0 : i32, i32
  }
  func.func @transform_2(%arg0: i32) -> (i32, i32) {
    %c0_i32 = arith.constant 0 : i32
    %c0_i32_0 = arith.constant 0 : i32
    return %c0_i32, %arg0 : i32, i32
  }
  func.func @transform_3(%arg0: i32) -> (i32, i32) {
    %c0_i32 = arith.constant 0 : i32
    %c0_i32_0 = arith.constant 0 : i32
    return %c0_i32, %arg0 : i32, i32
  }
}

</mosaic_0001>

<llo_original>
// kernel: tpu_custom_call.1
$region0: #{tpu_custom_call.1}
  #allocation0 [shape = 'u32[]', space=smem, size = 0x4, offset = 0x4, fixed_abs, tag = 'smem constant byte address 0x4 - core index']
  #allocation1 [shape = 'u32[144,128]{1,0:T(1,128)}', space=vmem, size = 0x12000, scoped, tag = 'internal scratch']
  %s0 = inlined_call_operand.hbm [shape: bf16[16,32], index: 0, kind: input, shape index: {}]
  %s1 = inlined_call_operand.hbm [shape: bf16[32,256], index: 1, kind: input, shape index: {}]
  %s2 = inlined_call_operand.vmem [shape: f32[1,256], index: 2, kind: input, shape index: {}]
  %s3 = inlined_call_operand.hbm [shape: bf16[16,256], index: 3, kind: output, shape index: {}]
  %s4 = sld [smem:[#allocation0]]
  $region30: #{tpu_custom_call.1} parent=0
    _
  %s6 = ssub.s32 1, %s4
  %s7 = scalar_select 0, %s6, %s4
  $region1: #{tpu_custom_call.1} parent=0
    #allocation2 [shape = 'u8[4096]{0}', space=vmem, size = 0x1000, scoped, tag = 'input window, operand 0, single buffered']
    #allocation3 [shape = 's32[1]{0}', space=sflag, size = 0x4, scoped, tag = 'scoped memory for tpu_custom_call.1']
    #allocation4 [shape = 's32[1]{0}', space=sflag, size = 0x4, scoped, tag = 'scoped memory for tpu_custom_call.1']
    #allocation5 [shape = 'u8[16384]{0}', space=vmem, size = 0x4000, scoped, tag = 'input window, operand 1, single buffered']
    #allocation6 [shape = 's32[1]{0}', space=sflag, size = 0x4, scoped, tag = 'scoped memory for tpu_custom_call.1']
    #allocation7 [shape = 'u8[8192]{0}', space=vmem, size = 0x2000, scoped, tag = 'output window, operand 0, single buffered']
    %8 = vsyncpa [#allocation3], 0
    %9 = vsyncpa [#allocation6], 0
    %10 = vsyncpa [#allocation4], 0
    // Predicated region
    $region2: #{tpu_custom_call.1} parent=1 // pred_check
      _
    $region3: #{tpu_custom_call.1} parent=1 // pred_check_branch
      %12 = sbr.rel (0) target = $region5
    $region4: #{tpu_custom_call.1} parent=1 // pred_region
      %s14 = ssub.s32 128, 128
      %15 = vsyncadd [#allocation3], %s14
      %s16 = sshll.u32 [#allocation2], 4
      %s17 = int_to_ptr.vmem [resolvable:$true] %s16
      %22 = dma.hbm_to_vmem [thread:$0]  %s0, 128, %s17, [#allocation3], 64, 64, 4
    $region5: #{tpu_custom_call.1} parent=1 // pred_fallthru
      _
    // Predicated region
    $region6: #{tpu_custom_call.1} parent=1 // pred_check
      _
    $region7: #{tpu_custom_call.1} parent=1 // pred_check_branch
      %24 = sbr.rel (0) target = $region9
    $region8: #{tpu_custom_call.1} parent=1 // pred_region
      %s26 = ssub.s32 512, 512
      %27 = vsyncadd [#allocation6], %s26
      %s28 = sshll.u32 [#allocation5], 4
      %s29 = int_to_ptr.vmem [resolvable:$true] %s28
      %34 = dma.hbm_to_vmem [thread:$0]  %s1, 512, %s29, [#allocation6], 128, 128, 8
    $region9: #{tpu_custom_call.1} parent=1 // pred_fallthru
      _
    // Predicated region
    $region10: #{tpu_custom_call.1} parent=1 // pred_check
      _
    $region11: #{tpu_custom_call.1} parent=1 // pred_check_branch
      %36 = sbr.rel (0) target = $region13
    $region12: #{tpu_custom_call.1} parent=1 // pred_region
      _
    $region13: #{tpu_custom_call.1} parent=1 // pred_fallthru
      _
    // Predicated region
    $region14: #{tpu_custom_call.1} parent=1 // pred_check
      _
    $region15: #{tpu_custom_call.1} parent=1 // pred_check_branch
      %38 = sbr.rel (0) target = $region17
    $region16: #{tpu_custom_call.1} parent=1 // pred_region
      %39 = dma.done [#allocation3], 128
    $region17: #{tpu_custom_call.1} parent=1 // pred_fallthru
      _
    // Predicated region
    $region18: #{tpu_custom_call.1} parent=1 // pred_check
      _
    $region19: #{tpu_custom_call.1} parent=1 // pred_check_branch
      %41 = sbr.rel (0) target = $region21
    $region20: #{tpu_custom_call.1} parent=1 // pred_region
      %42 = dma.done [#allocation6], 512
    $region21: #{tpu_custom_call.1} parent=1 // pred_fallthru
      _
    %v44 = vld [vmem:[#allocation2] sm:$0xf]
    %v45 = vld [vmem:[#allocation2 + $0x4] sm:$0xf]
    %v46 = vld [vmem:[#allocation5] sm:$0xff]
    %v47 = vld [vmem:[#allocation5 + $0x8] sm:$0xff]
    %v48 = vld [vmem:[#allocation5 + $0x10] sm:$0xff]
    %v49 = vld [vmem:[#allocation5 + $0x18] sm:$0xff]
    %v50 = vld [vmem:[%s2] sm:$0x3]
    %v52 = vlaneseq
    %v53 = vshrl.u32 %v52, 7
    %v54 = vsub.s32 0, %v53
    %v55 = vrot.slane %v50, %v54
    %v56 = vlaneseq
    %v57 = vshrl.u32 %v56, 7
    %v58 = vsub.s32 1, %v57
    %v59 = vrot.slane %v50, %v58
    %v64 = vunpack.c.l.b16 %v44
    %v65 = vunpack.c.l.b16 %v45
    %v66 = vpack.c.b16 %v65, %v64
    %v71 = vunpack.c.l.b16 %v46
    %v72 = vunpack.c.h.b16 %v46
    %v73 = vunpack.c.l.b16 %v47
    %v74 = vunpack.c.h.b16 %v47
    %v75 = vunpack.c.l.b16 %v48
    %v76 = vunpack.c.h.b16 %v48
    %v77 = vunpack.c.l.b16 %v49
    %v78 = vunpack.c.h.b16 %v49
    %v79 = vpack.c.b16 %v73, %v71
    %v80 = vpack.c.b16 %v74, %v72
    %v81 = vpack.c.b16 %v77, %v75
    %v82 = vpack.c.b16 %v78, %v76
    %vm87 = vcmask 261120
    %v89 = vsel %vm87, %v66, 0
    %91 = vmatprep.subr.bf16.mxu0 %v80
    %92 = vmatpush1.bf16.msra.mxu0 %v79
    %93 = vmatprep.subr.bf16.mxu0 %v82
    %94 = vmatpush1.bf16.msra.mxu0 %v81
    %95 = vmatprep.subr.bf16.mxu0 0
    %96 = vmatpush1.bf16.msra.mxu0 0
    %97 = vmatprep.subr.bf16.mxu0 0
    %98 = vmatpush1.bf16.msra.mxu0 0
    %99 = vmatprep.subr.bf16.mxu0 0
    %100 = vmatpush1.bf16.msra.mxu0 0
    %101 = vmatprep.subr.bf16.mxu0 0
    %102 = vmatpush1.bf16.msra.mxu0 0
    %103 = vmatprep.subr.bf16.mxu0 0
    %104 = vmatpush1.bf16.msra.mxu0 0
    %105 = vmatprep.subr.bf16.mxu0 0
    %106 = vmatpush1.bf16.msra.mxu0 0
    %107 = vmatprep.subr.bf16.mxu0 0
    %108 = vmatpush1.bf16.msra.mxu0 0
    %109 = vmatprep.subr.bf16.mxu0 0
    %110 = vmatpush1.bf16.msra.mxu0 0
    %111 = vmatprep.subr.bf16.mxu0 0
    %112 = vmatpush1.bf16.msra.mxu0 0
    %113 = vmatprep.subr.bf16.mxu0 0
    %114 = vmatpush1.bf16.msra.mxu0 0
    %115 = vmatprep.subr.bf16.mxu0 0
    %116 = vmatpush1.bf16.msra.mxu0 0
    %117 = vmatprep.subr.bf16.mxu0 0
    %118 = vmatpush1.bf16.msra.mxu0 0
    %119 = vmatprep.subr.bf16.mxu0 0
    %120 = vmatpush1.bf16.msra.mxu0 0
    %121 = vmatprep.subr.bf16.mxu0 0
    %122 = vmatpush1.bf16.msra.mxu0 0
    %123 = vmatprep.mubr.bf16.mxu0 0
    %124 = vmatmul.mubr.bf16.gmra.mrb[0].mxu0 %v89
    %v125 = vpop.f32.mrb[0].mxu0
    %v126 = vadd.f32 %v55, %v125
    %v127 = vpop.f32.mrb[0].mxu0
    %v128 = vadd.f32 %v59, %v127
    %v129 = vpop.f32.mrb[0].mxu0
    %v130 = vadd.f32 %v55, %v129
    %v131 = vpop.f32.mrb[0].mxu0
    %v132 = vadd.f32 %v59, %v131
    %133 = vdwg.mxu0
    %v134 = vpack.c.bf16 %v130, %v126
    %v135 = vpack.c.bf16 %v132, %v128
    %v138 = vunpack.c.l.b16 %v134
    %v139 = vunpack.c.l.b16 %v135
    %v140 = vunpack.c.h.b16 %v134
    %v141 = vunpack.c.h.b16 %v135
    %v142 = vpack.c.b16 %v139, %v138
    %v143 = vpack.c.b16 %v141, %v140
    %146 = vst [vmem:[#allocation7] sm:$0xff] %v142
    %147 = vst [vmem:[#allocation7 + $0x8] sm:$0xff] %v143
    // Predicated region
    $region22: #{tpu_custom_call.1} parent=1 // pred_check
      _
    $region23: #{tpu_custom_call.1} parent=1 // pred_check_branch
      %149 = sbr.rel (0) target = $region25
    $region24: #{tpu_custom_call.1} parent=1 // pred_region
      %s151 = ssub.s32 256, 256
      %152 = vsyncadd [#allocation4], %s151
      %s153 = sshll.u32 [#allocation7], 4
      %s154 = int_to_ptr.vmem [resolvable:$true] %s153
      %159 = dma.vmem_to_hbm [thread:$0]  %s154, 256, %s3, [#allocation4], 128, 128, 8
    $region25: #{tpu_custom_call.1} parent=1 // pred_fallthru
      _
    // Predicated region
    $region26: #{tpu_custom_call.1} parent=1 // pred_check
      _
    $region27: #{tpu_custom_call.1} parent=1 // pred_check_branch
      %161 = sbr.rel (0) target = $region29
    $region28: #{tpu_custom_call.1} parent=1 // pred_region
      %162 = dma.done [#allocation4], 256
    $region29: #{tpu_custom_call.1} parent=1 // pred_fallthru
      _
    %163 = vsyncpa [#allocation3], 1
    %164 = vsyncpa [#allocation6], 1
    %165 = vsyncpa [#allocation4], 1

</llo_original>
